<compile_context>
chip_gen: v7x
topology: tpu7x:2x2x1
jax: 0.10.0
libtpu: 0.0.40
codegen_flags: <defaults>
</compile_context>

<pallas_src>
import functools

import jax
import jax.numpy as jnp
from jax import lax
from jax.experimental import pallas as pl
from jax.experimental.pallas import tpu as pltpu


def _deq_kernel(inj_ref, w_ref, z_ref, *, max_iter, tol, unroll):
    inj = inj_ref[...]                      # [Bp, D] f32 (loop-invariant)
    w = w_ref[...]                          # [D, D]  bf16

    def f(z):
        zw = jnp.dot(z.astype(jnp.bfloat16), w,
                     preferred_element_type=jnp.float32)
        return jnp.tanh(zw + inj)

    tol2 = tol * tol

    def not_converged(fz, z):
        # torch: (fz - z).norm() / (1e-5 + fz.norm()) >= tol, rearranged to a
        # single fused reduction with no divide / sqrt / epsilon on the serial
        # check path (slightly stricter than torch's form; see header note).
        d = fz - z
        gap = jnp.sum(d * d - tol2 * (fz * fz))
        return gap >= 1e-12

    # solver: forward iteration starting from torch.zeros_like(x)
    f0 = f(jnp.zeros_like(inj))

    def cond(carry):
        k, _, keep_going = carry
        return jnp.logical_and(k < max_iter, keep_going > 0)

    def body(carry):
        k, fz, _ = carry
        # `unroll` f() applications per convergence check.  Near the fixed
        # point the (at most unroll-1) extra applications of the contraction
        # only move the iterate closer to z*, so the result stays within
        # tolerance of torch's per-iteration break.
        prev = fz
        for _ in range(unroll):
            prev, fz = fz, f(fz)
        keep_going = not_converged(fz, prev).astype(jnp.int32)
        return k + unroll, fz, keep_going

    _, f0, _ = lax.while_loop(cond, body, (jnp.int32(0), f0, jnp.int32(1)))

    # TODO(synk): `self.forward_res` (python list of per-iteration residuals
    # stored as a torch module attribute) is not materialized as a kernel output.
    # TODO(synk): backward_hook / the backward fixed-point solve affects
    # gradients only, not the forward result, so it is not implemented here.

    # forward() applies f once more after the no_grad solve.
    z_ref[...] = f(f0)


def deq_fixed_point(x_nchw, w, u, b, *, max_iter=40, tol=1e-3, unroll=4):
    B, C, H, W_ = x_nchw.shape
    D = C * H * W_
    assert D % 128 == 0, "lane dim D must be a multiple of 128 for this kernel"
    x = x_nchw.reshape(B, D).astype(jnp.float32)

    # Input injection is iteration-invariant: compute it once here so U[D, D]
    # never occupies kernel VMEM or HBM->VMEM DMA bandwidth.
    inj = x @ u.astype(jnp.float32) + b.astype(jnp.float32)      # [B, D] f32

    # Pad batch to the bf16 sublane tile (16); padded rows have inj == 0, so
    # every iterate there is exactly 0 and the residual needs no masking.
    Bp = ((B + 15) // 16) * 16
    inj_p = jnp.zeros((Bp, D), jnp.float32).at[:B].set(inj)

    w_bf16 = w.astype(jnp.bfloat16)

    # VMEM budgeting: keep W resident; size the scoped limit from the real
    # footprint, and single-buffer the resident operands once W is large
    # (grid has a single step and constant index maps -> nothing to prefetch).
    w_bytes = 2 * D * D                       # bf16 W
    io_bytes = 4 * Bp * D * 3                 # f32 inj + out (+ headroom for carry)
    big = 2 * (w_bytes + io_bytes) > (8 << 20)
    pipe_mode = pl.Buffered(1) if big else None
    bufs = 1 if big else 2
    vmem_limit = min(max(bufs * (w_bytes + io_bytes) + (4 << 20), 16 << 20),
                     100 << 20)

    kernel = functools.partial(_deq_kernel, max_iter=max_iter, tol=tol,
                               unroll=unroll)
    z = pl.pallas_call(
        kernel,
        out_shape=jax.ShapeDtypeStruct((Bp, D), jnp.float32),
        grid=(1,),
        in_specs=[
            pl.BlockSpec((Bp, D), lambda i: (0, 0), pipeline_mode=pipe_mode),
            pl.BlockSpec((D, D), lambda i: (0, 0), pipeline_mode=pipe_mode),
        ],
        out_specs=pl.BlockSpec((Bp, D), lambda i: (0, 0)),
        compiler_params=pltpu.CompilerParams(
            dimension_semantics=("arbitrary",),
            vmem_limit_bytes=vmem_limit,
        ),
    )(inj_p, w_bf16)
    return z[:B].reshape(B, C, H, W_)


def deq_reference(x_nchw, w, u, b, *, max_iter=40, tol=1e-3):
    """Plain-JAX f32 reference mirroring the torch forward semantics exactly."""
    B, C, H, W_ = x_nchw.shape
    D = C * H * W_
    x = x_nchw.reshape(B, D).astype(jnp.float32)
    inj = x @ u + b
    f = lambda z: jnp.tanh(z @ w + inj)
    f0 = f(jnp.zeros_like(x))
    for _ in range(max_iter):
        z = f0
        f0 = f(z)
        rel = float(jnp.linalg.norm(f0 - z) / (1e-5 + jnp.linalg.norm(f0)))
        if rel < tol:
            break
    return f(f0).reshape(B, C, H, W_)


if __name__ == "__main__":
    B, C, H, W = 2, 4, 8, 8
    D = C * H * W

    key = jax.random.PRNGKey(0)
    kx, kw, ku, kb = jax.random.split(key, 4)
    x = jax.random.normal(kx, (B, C, H, W), dtype=jnp.float32)
    # W scaled so its spectral norm is < 1 (contraction -> fixed point exists).
    w = jax.random.normal(kw, (D, D), dtype=jnp.float32) * (0.4 / jnp.sqrt(D))
    u = jax.random.normal(ku, (D, D), dtype=jnp.float32) * (1.0 / jnp.sqrt(D))
    b = jax.random.normal(kb, (1, D), dtype=jnp.float32) * 0.1

    z = deq_fixed_point(x, w, u, b, max_iter=40, tol=1e-3)
    z = jax.block_until_ready(z)

    z_ref = deq_reference(x, w, u, b, max_iter=40, tol=1e-3)
    assert z.shape == x.shape and z.dtype == jnp.float32
    assert bool(jnp.all(jnp.isfinite(z)))
    assert bool(jnp.allclose(z, z_ref, rtol=2e-2, atol=2e-2)), float(
        jnp.max(jnp.abs(z - z_ref))
    )
    print("KERNEL_OK")
</pallas_src>

<mosaic_0001>
module attributes {stable_mosaic.version = 11 : i64} {
  func.func @_deq_kernel(%arg0: i32, %arg1: memref<16x256xf32, #tpu.memory_space<vmem>>, %arg2: memref<256x256xbf16, #tpu.memory_space<vmem>>, %arg3: memref<16x256xf32, #tpu.memory_space<vmem>>) attributes {dimension_semantics = [#tpu.dimension_semantics<arbitrary>], iteration_bounds = array<i64: 1>, scalar_prefetch = 0 : i64, scratch_operands = 0 : i64, tpu.core_type = #tpu.core_type<tc>, window_params = [{pipeline_mode = #tpu.pipeline_mode<synchronous>, transform_indices = @transform_0, window_bounds = array<i64: 16, 256>}, {pipeline_mode = #tpu.pipeline_mode<synchronous>, transform_indices = @transform_1, window_bounds = array<i64: 256, 256>}, {pipeline_mode = #tpu.pipeline_mode<synchronous>, transform_indices = @transform_2, window_bounds = array<i64: 16, 256>}]} {
    %c0 = arith.constant 0 : index
    %c0_0 = arith.constant 0 : index
    %0 = vector.load %arg1[%c0, %c0_0] : memref<16x256xf32, #tpu.memory_space<vmem>>, vector<16x256xf32>
    %c0_1 = arith.constant 0 : index
    %c0_2 = arith.constant 0 : index
    %1 = vector.load %arg2[%c0_1, %c0_2] : memref<256x256xbf16, #tpu.memory_space<vmem>>, vector<256x256xbf16>
    %cst = arith.constant 0.000000e+00 : f32
    %2 = vector.broadcast %cst : f32 to vector<16x256xf32>
    %3 = arith.truncf %2 : vector<16x256xf32> to vector<16x256xbf16>
    %cst_3 = arith.constant dense<0.000000e+00> : vector<16x256xf32>
    %4 = tpu.matmul %3, %1, %cst_3 {dimension_numbers = #tpu.dot_dimension_numbers<[1], [0], [0], [1], [0, 0, 1, 1], [], []>} : vector<16x256xbf16>, vector<256x256xbf16>, vector<16x256xf32> -> vector<16x256xf32>
    %5 = arith.addf %4, %0 : vector<16x256xf32>
    %6 = math.tanh %5 : vector<16x256xf32>
    %c0_i32 = arith.constant 0 : i32
    %c1_i32 = arith.constant 1 : i32
    %7:3 = scf.while (%arg4 = %c0_i32, %arg5 = %6, %arg6 = %c1_i32) : (i32, vector<16x256xf32>, i32) -> (i32, vector<16x256xf32>, i32) {
      %c40_i32 = arith.constant 40 : i32
      %13 = arith.cmpi slt, %arg4, %c40_i32 : i32
      %c0_i32_7 = arith.constant 0 : i32
      %14 = arith.cmpi sgt, %arg6, %c0_i32_7 : i32
      %15 = arith.andi %13, %14 : i1
      scf.condition(%15) %arg4, %arg5, %arg6 : i32, vector<16x256xf32>, i32
    } do {
    ^bb0(%arg4: i32, %arg5: vector<16x256xf32>, %arg6: i32):
      %13 = arith.truncf %arg5 : vector<16x256xf32> to vector<16x256xbf16>
      %cst_7 = arith.constant dense<0.000000e+00> : vector<16x256xf32>
      %14 = tpu.matmul %13, %1, %cst_7 {dimension_numbers = #tpu.dot_dimension_numbers<[1], [0], [0], [1], [0, 0, 1, 1], [], []>} : vector<16x256xbf16>, vector<256x256xbf16>, vector<16x256xf32> -> vector<16x256xf32>
      %15 = arith.addf %14, %0 : vector<16x256xf32>
      %16 = math.tanh %15 : vector<16x256xf32>
      %17 = arith.truncf %16 : vector<16x256xf32> to vector<16x256xbf16>
      %cst_8 = arith.constant dense<0.000000e+00> : vector<16x256xf32>
      %18 = tpu.matmul %17, %1, %cst_8 {dimension_numbers = #tpu.dot_dimension_numbers<[1], [0], [0], [1], [0, 0, 1, 1], [], []>} : vector<16x256xbf16>, vector<256x256xbf16>, vector<16x256xf32> -> vector<16x256xf32>
      %19 = arith.addf %18, %0 : vector<16x256xf32>
      %20 = math.tanh %19 : vector<16x256xf32>
      %21 = arith.truncf %20 : vector<16x256xf32> to vector<16x256xbf16>
      %cst_9 = arith.constant dense<0.000000e+00> : vector<16x256xf32>
      %22 = tpu.matmul %21, %1, %cst_9 {dimension_numbers = #tpu.dot_dimension_numbers<[1], [0], [0], [1], [0, 0, 1, 1], [], []>} : vector<16x256xbf16>, vector<256x256xbf16>, vector<16x256xf32> -> vector<16x256xf32>
      %23 = arith.addf %22, %0 : vector<16x256xf32>
      %24 = math.tanh %23 : vector<16x256xf32>
      %25 = arith.truncf %24 : vector<16x256xf32> to vector<16x256xbf16>
      %cst_10 = arith.constant dense<0.000000e+00> : vector<16x256xf32>
      %26 = tpu.matmul %25, %1, %cst_10 {dimension_numbers = #tpu.dot_dimension_numbers<[1], [0], [0], [1], [0, 0, 1, 1], [], []>} : vector<16x256xbf16>, vector<256x256xbf16>, vector<16x256xf32> -> vector<16x256xf32>
      %27 = arith.addf %26, %0 : vector<16x256xf32>
      %28 = math.tanh %27 : vector<16x256xf32>
      %29 = arith.subf %28, %24 : vector<16x256xf32>
      %30 = arith.mulf %29, %29 : vector<16x256xf32>
      %31 = arith.mulf %28, %28 : vector<16x256xf32>
      %cst_11 = arith.constant 9.99999997E-7 : f32
      %32 = vector.broadcast %cst_11 : f32 to vector<16x256xf32>
      %33 = arith.mulf %32, %31 : vector<16x256xf32>
      %34 = arith.subf %30, %33 : vector<16x256xf32>
      %35 = vector.shape_cast %34 : vector<16x256xf32> to vector<1x16x256xf32>
      %cst_12 = arith.constant dense<0.000000e+00> : vector<1xf32>
      %36 = vector.multi_reduction <add>, %35, %cst_12 [1, 2] : vector<1x16x256xf32> to vector<1xf32>
      %37 = vector.shape_cast %36 : vector<1xf32> to vector<1x1x1xf32>
      %38 = vector.extract %37[0, 0, 0] : f32 from vector<1x1x1xf32>
      %cst_13 = arith.constant 9.99999996E-13 : f32
      %39 = arith.cmpf oge, %38, %cst_13 : f32
      %40 = arith.extui %39 : i1 to i32
      %c4_i32 = arith.constant 4 : i32
      %41 = arith.addi %arg4, %c4_i32 : i32
      scf.yield %41, %28, %40 : i32, vector<16x256xf32>, i32
    }
    %8 = arith.truncf %7#1 : vector<16x256xf32> to vector<16x256xbf16>
    %cst_4 = arith.constant dense<0.000000e+00> : vector<16x256xf32>
    %9 = tpu.matmul %8, %1, %cst_4 {dimension_numbers = #tpu.dot_dimension_numbers<[1], [0], [0], [1], [0, 0, 1, 1], [], []>} : vector<16x256xbf16>, vector<256x256xbf16>, vector<16x256xf32> -> vector<16x256xf32>
    %10 = arith.addf %9, %0 : vector<16x256xf32>
    %11 = math.tanh %10 : vector<16x256xf32>
    %c0_5 = arith.constant 0 : index
    %c0_6 = arith.constant 0 : index
    %12 = vector.load %arg3[%c0_5, %c0_6] : memref<16x256xf32, #tpu.memory_space<vmem>>, vector<16x256xf32>
    tpu.vector_store %arg3[%c0_5, %c0_6], %11 {strides = array<i32>} : memref<16x256xf32, #tpu.memory_space<vmem>>, vector<16x256xf32>,
    return
  }
  func.func @transform_0(%arg0: i32) -> (i32, i32) {
    %c0_i32 = arith.constant 0 : i32
    %c0_i32_0 = arith.constant 0 : i32
    %c0_i32_1 = arith.constant 0 : i32
    return %c0_i32, %c0_i32_0 : i32, i32
  }
  func.func @transform_1(%arg0: i32) -> (i32, i32) {
    %c0_i32 = arith.constant 0 : i32
    %c0_i32_0 = arith.constant 0 : i32
    %c0_i32_1 = arith.constant 0 : i32
    return %c0_i32, %c0_i32_0 : i32, i32
  }
  func.func @transform_2(%arg0: i32) -> (i32, i32) {
    %c0_i32 = arith.constant 0 : i32
    %c0_i32_0 = arith.constant 0 : i32
    %c0_i32_1 = arith.constant 0 : i32
    return %c0_i32, %c0_i32_0 : i32, i32
  }
}

</mosaic_0001>

<llo_original>
// kernel: tpu_custom_call.1
$region0: #{tpu_custom_call.1}
  #allocation0 [shape = 'u32[]', space=smem, size = 0x4, offset = 0x4, fixed_abs, tag = 'smem constant byte address 0x4 - core index']
  #allocation1 [shape = 'u32[144,128]{1,0:T(1,128)}', space=vmem, size = 0x12000, scoped, tag = 'internal scratch']
  %s0 = inlined_call_operand.hbm [shape: f32[16,256], index: 0, kind: input, shape index: {}]
  %s1 = inlined_call_operand.hbm [shape: bf16[256,256], index: 1, kind: input, shape index: {}]
  %s2 = inlined_call_operand.hbm [shape: f32[16,256], index: 2, kind: output, shape index: {}]
  %s3 = sld [smem:[#allocation0]]
  $region33: #{tpu_custom_call.1} parent=0
    _
  %s5 = ssub.s32 1, %s3
  %s6 = scalar_select 0, %s5, %s3
  $region1: #{tpu_custom_call.1} parent=0
    #allocation2 [shape = 'u8[16384]{0}', space=vmem, size = 0x4000, scoped, tag = 'input window, operand 0, single buffered']
    #allocation3 [shape = 's32[1]{0}', space=sflag, size = 0x4, scoped, tag = 'scoped memory for tpu_custom_call.1']
    #allocation4 [shape = 's32[1]{0}', space=sflag, size = 0x4, scoped, tag = 'scoped memory for tpu_custom_call.1']
    #allocation5 [shape = 'u8[131072]{0}', space=vmem, size = 0x20000, scoped, tag = 'input window, operand 1, single buffered']
    #allocation6 [shape = 's32[1]{0}', space=sflag, size = 0x4, scoped, tag = 'scoped memory for tpu_custom_call.1']
    #allocation7 [shape = 'u8[16384]{0}', space=vmem, size = 0x4000, scoped, tag = 'output window, operand 0, single buffered']
    %7 = vsyncpa [#allocation3], 0
    %8 = vsyncpa [#allocation6], 0
    %9 = vsyncpa [#allocation4], 0
    // Predicated region
    $region2: #{tpu_custom_call.1} parent=1 // pred_check
      _
    $region3: #{tpu_custom_call.1} parent=1 // pred_check_branch
      %11 = sbr.rel (0) target = $region5
    $region4: #{tpu_custom_call.1} parent=1 // pred_region
      %s13 = ssub.s32 512, 512
      %14 = vsyncadd [#allocation3], %s13
      %s15 = sshll.u32 [#allocation2], 4
      %s16 = int_to_ptr.vmem [resolvable:$true] %s15
      %21 = dma.hbm_to_vmem [thread:$0]  %s0, 512, %s16, [#allocation3], 256, 256, 16
    $region5: #{tpu_custom_call.1} parent=1 // pred_fallthru
      _
    // Predicated region
    $region6: #{tpu_custom_call.1} parent=1 // pred_check
      _
    $region7: #{tpu_custom_call.1} parent=1 // pred_check_branch
      %23 = sbr.rel (0) target = $region9
    $region8: #{tpu_custom_call.1} parent=1 // pred_region
      %s25 = ssub.s32 4096, 4096
      %26 = vsyncadd [#allocation6], %s25
      %s27 = sshll.u32 [#allocation5], 4
      %s28 = int_to_ptr.vmem [resolvable:$true] %s27
      %33 = dma.hbm_to_vmem [thread:$0]  %s1, 4096, %s28, [#allocation6], 128, 128, 8
    $region9: #{tpu_custom_call.1} parent=1 // pred_fallthru
      _
    // Predicated region
    $region10: #{tpu_custom_call.1} parent=1 // pred_check
      _
    $region11: #{tpu_custom_call.1} parent=1 // pred_check_branch
      %35 = sbr.rel (0) target = $region13
    $region12: #{tpu_custom_call.1} parent=1 // pred_region
      %36 = dma.done [#allocation3], 512
    $region13: #{tpu_custom_call.1} parent=1 // pred_fallthru
      _
    // Predicated region
    $region14: #{tpu_custom_call.1} parent=1 // pred_check
      _
    $region15: #{tpu_custom_call.1} parent=1 // pred_check_branch
      %38 = sbr.rel (0) target = $region17
    $region16: #{tpu_custom_call.1} parent=1 // pred_region
      %39 = dma.done [#allocation6], 4096
    $region17: #{tpu_custom_call.1} parent=1 // pred_fallthru
      _
    %v41 = vld [vmem:[#allocation2] sm:$0xff]
    %v42 = vld [vmem:[#allocation2 + $0x8] sm:$0xff]
    %v43 = vld [vmem:[#allocation2 + $0x10] sm:$0xff]
    %v44 = vld [vmem:[#allocation2 + $0x18] sm:$0xff]
    %v45 = vld [vmem:[#allocation5] sm:$0xff]
    %v46 = vld [vmem:[#allocation5 + $0x8] sm:$0xff]
    %v47 = vld [vmem:[#allocation5 + $0x10] sm:$0xff]
    %v48 = vld [vmem:[#allocation5 + $0x18] sm:$0xff]
    %v49 = vld [vmem:[#allocation5 + $0x20] sm:$0xff]
    %v50 = vld [vmem:[#allocation5 + $0x28] sm:$0xff]
    %v51 = vld [vmem:[#allocation5 + $0x30] sm:$0xff]
    %v52 = vld [vmem:[#allocation5 + $0x38] sm:$0xff]
    %v53 = vld [vmem:[#allocation5 + $0x40] sm:$0xff]
    %v54 = vld [vmem:[#allocation5 + $0x48] sm:$0xff]
    %v55 = vld [vmem:[#allocation5 + $0x50] sm:$0xff]
    %v56 = vld [vmem:[#allocation5 + $0x58] sm:$0xff]
    %v57 = vld [vmem:[#allocation5 + $0x60] sm:$0xff]
    %v58 = vld [vmem:[#allocation5 + $0x68] sm:$0xff]
    %v59 = vld [vmem:[#allocation5 + $0x70] sm:$0xff]
    %v60 = vld [vmem:[#allocation5 + $0x78] sm:$0xff]
    %v61 = vld [vmem:[#allocation5 + $0x80] sm:$0xff]
    %v62 = vld [vmem:[#allocation5 + $0x88] sm:$0xff]
    %v63 = vld [vmem:[#allocation5 + $0x90] sm:$0xff]
    %v64 = vld [vmem:[#allocation5 + $0x98] sm:$0xff]
    %v65 = vld [vmem:[#allocation5 + $0xa0] sm:$0xff]
    %v66 = vld [vmem:[#allocation5 + $0xa8] sm:$0xff]
    %v67 = vld [vmem:[#allocation5 + $0xb0] sm:$0xff]
    %v68 = vld [vmem:[#allocation5 + $0xb8] sm:$0xff]
    %v69 = vld [vmem:[#allocation5 + $0xc0] sm:$0xff]
    %v70 = vld [vmem:[#allocation5 + $0xc8] sm:$0xff]
    %v71 = vld [vmem:[#allocation5 + $0xd0] sm:$0xff]
    %v72 = vld [vmem:[#allocation5 + $0xd8] sm:$0xff]
    %v73 = vld [vmem:[#allocation5 + $0xe0] sm:$0xff]
    %v74 = vld [vmem:[#allocation5 + $0xe8] sm:$0xff]
    %v75 = vld [vmem:[#allocation5 + $0xf0] sm:$0xff]
    %v76 = vld [vmem:[#allocation5 + $0xf8] sm:$0xff]
    %v109 = vunpack.c.l.b16 %v45
    %v110 = vunpack.c.h.b16 %v45
    %v111 = vunpack.c.l.b16 %v46
    %v112 = vunpack.c.h.b16 %v46
    %v113 = vunpack.c.l.b16 %v47
    %v114 = vunpack.c.h.b16 %v47
    %v115 = vunpack.c.l.b16 %v48
    %v116 = vunpack.c.h.b16 %v48
    %v117 = vunpack.c.l.b16 %v49
    %v118 = vunpack.c.h.b16 %v49
    %v119 = vunpack.c.l.b16 %v50
    %v120 = vunpack.c.h.b16 %v50
    %v121 = vunpack.c.l.b16 %v51
    %v122 = vunpack.c.h.b16 %v51
    %v123 = vunpack.c.l.b16 %v52
    %v124 = vunpack.c.h.b16 %v52
    %v125 = vunpack.c.l.b16 %v53
    %v126 = vunpack.c.h.b16 %v53
    %v127 = vunpack.c.l.b16 %v54
    %v128 = vunpack.c.h.b16 %v54
    %v129 = vunpack.c.l.b16 %v55
    %v130 = vunpack.c.h.b16 %v55
    %v131 = vunpack.c.l.b16 %v56
    %v132 = vunpack.c.h.b16 %v56
    %v133 = vunpack.c.l.b16 %v57
    %v134 = vunpack.c.h.b16 %v57
    %v135 = vunpack.c.l.b16 %v58
    %v136 = vunpack.c.h.b16 %v58
    %v137 = vunpack.c.l.b16 %v59
    %v138 = vunpack.c.h.b16 %v59
    %v139 = vunpack.c.l.b16 %v60
    %v140 = vunpack.c.h.b16 %v60
    %v141 = vunpack.c.l.b16 %v61
    %v142 = vunpack.c.h.b16 %v61
    %v143 = vunpack.c.l.b16 %v62
    %v144 = vunpack.c.h.b16 %v62
    %v145 = vunpack.c.l.b16 %v63
    %v146 = vunpack.c.h.b16 %v63
    %v147 = vunpack.c.l.b16 %v64
    %v148 = vunpack.c.h.b16 %v64
    %v149 = vunpack.c.l.b16 %v65
    %v150 = vunpack.c.h.b16 %v65
    %v151 = vunpack.c.l.b16 %v66
    %v152 = vunpack.c.h.b16 %v66
    %v153 = vunpack.c.l.b16 %v67
    %v154 = vunpack.c.h.b16 %v67
    %v155 = vunpack.c.l.b16 %v68
    %v156 = vunpack.c.h.b16 %v68
    %v157 = vunpack.c.l.b16 %v69
    %v158 = vunpack.c.h.b16 %v69
    %v159 = vunpack.c.l.b16 %v70
    %v160 = vunpack.c.h.b16 %v70
    %v161 = vunpack.c.l.b16 %v71
    %v162 = vunpack.c.h.b16 %v71
    %v163 = vunpack.c.l.b16 %v72
    %v164 = vunpack.c.h.b16 %v72
    %v165 = vunpack.c.l.b16 %v73
    %v166 = vunpack.c.h.b16 %v73
    %v167 = vunpack.c.l.b16 %v74
    %v168 = vunpack.c.h.b16 %v74
    %v169 = vunpack.c.l.b16 %v75
    %v170 = vunpack.c.h.b16 %v75
    %v171 = vunpack.c.l.b16 %v76
    %v172 = vunpack.c.h.b16 %v76
    %v173 = vpack.c.b16 %v111, %v109
    %v174 = vpack.c.b16 %v112, %v110
    %v175 = vpack.c.b16 %v115, %v113
    %v176 = vpack.c.b16 %v116, %v114
    %v177 = vpack.c.b16 %v119, %v117
    %v178 = vpack.c.b16 %v120, %v118
    %v179 = vpack.c.b16 %v123, %v121
    %v180 = vpack.c.b16 %v124, %v122
    %v181 = vpack.c.b16 %v127, %v125
    %v182 = vpack.c.b16 %v128, %v126
    %v183 = vpack.c.b16 %v131, %v129
    %v184 = vpack.c.b16 %v132, %v130
    %v185 = vpack.c.b16 %v135, %v133
    %v186 = vpack.c.b16 %v136, %v134
    %v187 = vpack.c.b16 %v139, %v137
    %v188 = vpack.c.b16 %v140, %v138
    %v189 = vpack.c.b16 %v143, %v141
    %v190 = vpack.c.b16 %v144, %v142
    %v191 = vpack.c.b16 %v147, %v145
    %v192 = vpack.c.b16 %v148, %v146
    %v193 = vpack.c.b16 %v151, %v149
    %v194 = vpack.c.b16 %v152, %v150
    %v195 = vpack.c.b16 %v155, %v153
    %v196 = vpack.c.b16 %v156, %v154
    %v197 = vpack.c.b16 %v159, %v157
    %v198 = vpack.c.b16 %v160, %v158
    %v199 = vpack.c.b16 %v163, %v161
    %v200 = vpack.c.b16 %v164, %v162
    %v201 = vpack.c.b16 %v167, %v165
    %v202 = vpack.c.b16 %v168, %v166
    %v203 = vpack.c.b16 %v171, %v169
    %v204 = vpack.c.b16 %v172, %v170
    %237 = vmatprep.subr.bf16.mxu0 %v174
    %238 = vmatpush1.bf16.msra.mxu0 %v173
    %239 = vmatprep.subr.bf16.mxu0 %v176
    %240 = vmatpush1.bf16.msra.mxu0 %v175
    %241 = vmatprep.subr.bf16.mxu0 %v178
    %242 = vmatpush1.bf16.msra.mxu0 %v177
    %243 = vmatprep.subr.bf16.mxu0 %v180
    %244 = vmatpush1.bf16.msra.mxu0 %v179
    %245 = vmatprep.subr.bf16.mxu0 %v182
    %246 = vmatpush1.bf16.msra.mxu0 %v181
    %247 = vmatprep.subr.bf16.mxu0 %v184
    %248 = vmatpush1.bf16.msra.mxu0 %v183
    %249 = vmatprep.subr.bf16.mxu0 %v186
    %250 = vmatpush1.bf16.msra.mxu0 %v185
    %251 = vmatprep.subr.bf16.mxu0 %v188
    %252 = vmatpush1.bf16.msra.mxu0 %v187
    %253 = vmatprep.subr.bf16.mxu0 %v190
    %254 = vmatpush1.bf16.msra.mxu0 %v189
    %255 = vmatprep.subr.bf16.mxu0 %v192
    %256 = vmatpush1.bf16.msra.mxu0 %v191
    %257 = vmatprep.subr.bf16.mxu0 %v194
    %258 = vmatpush1.bf16.msra.mxu0 %v193
    %259 = vmatprep.subr.bf16.mxu0 %v196
    %260 = vmatpush1.bf16.msra.mxu0 %v195
    %261 = vmatprep.subr.bf16.mxu0 %v198
    %262 = vmatpush1.bf16.msra.mxu0 %v197
    %263 = vmatprep.subr.bf16.mxu0 %v200
    %264 = vmatpush1.bf16.msra.mxu0 %v199
    %265 = vmatprep.subr.bf16.mxu0 %v202
    %266 = vmatpush1.bf16.msra.mxu0 %v201
    %267 = vmatprep.subr.bf16.mxu0 %v204
    %268 = vmatpush1.bf16.msra.mxu0 %v203
    %269 = vmatprep.mubr.bf16.mxu0 0
    %270 = vmatmul.mubr.bf16.gmra.mrb[0].mxu0 0
    %v271 = vpop.f32.mrb[0].mxu0
    %v272 = vadd.f32 %v41, %v271
    %v273 = vpop.f32.mrb[0].mxu0
    %v274 = vadd.f32 %v42, %v273
    %v275 = vpop.f32.mrb[0].mxu0
    %v276 = vadd.f32 %v43, %v275
    %v277 = vpop.f32.mrb[0].mxu0
    %v278 = vadd.f32 %v44, %v277
    %279 = vdwg.mxu0
    %v280 = vtanh.pop %v272
    %v281 = vtanh.pop %v274
    %v282 = vtanh.pop %v276
    %v283 = vtanh.pop %v278
    // While loop
    $region18: #{tpu_custom_call.1} parent=1 // loop_pre_header
      _
    $region19: #{tpu_custom_call.1} parent=1 // loop_header
      %s285 = sphi 0, %s527
      %v286 = vphi %v280, %v489
      %v287 = vphi %v281, %v490
      %v288 = vphi %v282, %v491
      %v289 = vphi %v283, %v492
      %s290 = sphi 1, %s526
      %p291 = scmp.lt.s32.totalorder %s285, 40
      %p292 = scmp.gt.s32.totalorder %s290, 0
      %p293 = pnand %p291, %p292
      %p294 = pneg %p293
    $region20: #{tpu_custom_call.1} parent=1 // loop_header_branch
      %296 = sbr.rel (%p293) target = $region24
    $region21: #{tpu_custom_call.1} parent=1 // loop_body
      %v297 = vpack.c.bf16 %v288, %v286
      %v298 = vpack.c.bf16 %v289, %v287
      %299 = vmatprep.subr.bf16.mxu0 %v174
      %300 = vmatpush1.bf16.msra.mxu0 %v173
      %301 = vmatprep.subr.bf16.mxu0 %v176
      %302 = vmatpush1.bf16.msra.mxu0 %v175
      %303 = vmatprep.subr.bf16.mxu0 %v178
      %304 = vmatpush1.bf16.msra.mxu0 %v177
      %305 = vmatprep.subr.bf16.mxu0 %v180
      %306 = vmatpush1.bf16.msra.mxu0 %v179
      %307 = vmatprep.subr.bf16.mxu0 %v182
      %308 = vmatpush1.bf16.msra.mxu0 %v181
      %309 = vmatprep.subr.bf16.mxu0 %v184
      %310 = vmatpush1.bf16.msra.mxu0 %v183
      %311 = vmatprep.subr.bf16.mxu0 %v186
      %312 = vmatpush1.bf16.msra.mxu0 %v185
      %313 = vmatprep.subr.bf16.mxu0 %v188
      %314 = vmatpush1.bf16.msra.mxu0 %v187
      %315 = vmatprep.subr.bf16.mxu0 %v190
      %316 = vmatpush1.bf16.msra.mxu0 %v189
      %317 = vmatprep.subr.bf16.mxu0 %v192
      %318 = vmatpush1.bf16.msra.mxu0 %v191
      %319 = vmatprep.subr.bf16.mxu0 %v194
      %320 = vmatpush1.bf16.msra.mxu0 %v193
      %321 = vmatprep.subr.bf16.mxu0 %v196
      %322 = vmatpush1.bf16.msra.mxu0 %v195
      %323 = vmatprep.subr.bf16.mxu0 %v198
      %324 = vmatpush1.bf16.msra.mxu0 %v197
      %325 = vmatprep.subr.bf16.mxu0 %v200
      %326 = vmatpush1.bf16.msra.mxu0 %v199
      %327 = vmatprep.subr.bf16.mxu0 %v202
      %328 = vmatpush1.bf16.msra.mxu0 %v201
      %329 = vmatprep.subr.bf16.mxu0 %v204
      %330 = vmatpush1.bf16.msra.mxu0 %v203
      %331 = vmatprep.mubr.bf16.mxu0 %v298
      %332 = vmatmul.mubr.bf16.gmra.mrb[0].mxu0 %v297
      %v333 = vpop.f32.mrb[0].mxu0
      %v334 = vadd.f32 %v41, %v333
      %v335 = vpop.f32.mrb[0].mxu0
      %v336 = vadd.f32 %v42, %v335
      %v337 = vpop.f32.mrb[0].mxu0
      %v338 = vadd.f32 %v43, %v337
      %v339 = vpop.f32.mrb[0].mxu0
      %v340 = vadd.f32 %v44, %v339
      %341 = vdwg.mxu0
      %v342 = vtanh.pop %v334
      %v343 = vtanh.pop %v336
      %v344 = vtanh.pop %v338
      %v345 = vtanh.pop %v340
      %v346 = vpack.c.bf16 %v344, %v342
      %v347 = vpack.c.bf16 %v345, %v343
      %348 = vmatprep.subr.bf16.mxu0 %v174
      %349 = vmatpush1.bf16.msra.mxu0 %v173
      %350 = vmatprep.subr.bf16.mxu0 %v176
      %351 = vmatpush1.bf16.msra.mxu0 %v175
      %352 = vmatprep.subr.bf16.mxu0 %v178
      %353 = vmatpush1.bf16.msra.mxu0 %v177
      %354 = vmatprep.subr.bf16.mxu0 %v180
      %355 = vmatpush1.bf16.msra.mxu0 %v179
      %356 = vmatprep.subr.bf16.mxu0 %v182
      %357 = vmatpush1.bf16.msra.mxu0 %v181
      %358 = vmatprep.subr.bf16.mxu0 %v184
      %359 = vmatpush1.bf16.msra.mxu0 %v183
      %360 = vmatprep.subr.bf16.mxu0 %v186
      %361 = vmatpush1.bf16.msra.mxu0 %v185
      %362 = vmatprep.subr.bf16.mxu0 %v188
      %363 = vmatpush1.bf16.msra.mxu0 %v187
      %364 = vmatprep.subr.bf16.mxu0 %v190
      %365 = vmatpush1.bf16.msra.mxu0 %v189
      %366 = vmatprep.subr.bf16.mxu0 %v192
      %367 = vmatpush1.bf16.msra.mxu0 %v191
      %368 = vmatprep.subr.bf16.mxu0 %v194
      %369 = vmatpush1.bf16.msra.mxu0 %v193
      %370 = vmatprep.subr.bf16.mxu0 %v196
      %371 = vmatpush1.bf16.msra.mxu0 %v195
      %372 = vmatprep.subr.bf16.mxu0 %v198
      %373 = vmatpush1.bf16.msra.mxu0 %v197
      %374 = vmatprep.subr.bf16.mxu0 %v200
      %375 = vmatpush1.bf16.msra.mxu0 %v199
      %376 = vmatprep.subr.bf16.mxu0 %v202
      %377 = vmatpush1.bf16.msra.mxu0 %v201
      %378 = vmatprep.subr.bf16.mxu0 %v204
      %379 = vmatpush1.bf16.msra.mxu0 %v203
      %380 = vmatprep.mubr.bf16.mxu0 %v347
      %381 = vmatmul.mubr.bf16.gmra.mrb[0].mxu0 %v346
      %v382 = vpop.f32.mrb[0].mxu0
      %v383 = vadd.f32 %v41, %v382
      %v384 = vpop.f32.mrb[0].mxu0
      %v385 = vadd.f32 %v42, %v384
      %v386 = vpop.f32.mrb[0].mxu0
      %v387 = vadd.f32 %v43, %v386
      %v388 = vpop.f32.mrb[0].mxu0
      %v389 = vadd.f32 %v44, %v388
      %390 = vdwg.mxu0
      %v391 = vtanh.pop %v383
      %v392 = vtanh.pop %v385
      %v393 = vtanh.pop %v387
      %v394 = vtanh.pop %v389
      %v395 = vpack.c.bf16 %v393, %v391
      %v396 = vpack.c.bf16 %v394, %v392
      %397 = vmatprep.subr.bf16.mxu0 %v174
      %398 = vmatpush1.bf16.msra.mxu0 %v173
      %399 = vmatprep.subr.bf16.mxu0 %v176
      %400 = vmatpush1.bf16.msra.mxu0 %v175
      %401 = vmatprep.subr.bf16.mxu0 %v178
      %402 = vmatpush1.bf16.msra.mxu0 %v177
      %403 = vmatprep.subr.bf16.mxu0 %v180
      %404 = vmatpush1.bf16.msra.mxu0 %v179
      %405 = vmatprep.subr.bf16.mxu0 %v182
      %406 = vmatpush1.bf16.msra.mxu0 %v181
      %407 = vmatprep.subr.bf16.mxu0 %v184
      %408 = vmatpush1.bf16.msra.mxu0 %v183
      %409 = vmatprep.subr.bf16.mxu0 %v186
      %410 = vmatpush1.bf16.msra.mxu0 %v185
      %411 = vmatprep.subr.bf16.mxu0 %v188
      %412 = vmatpush1.bf16.msra.mxu0 %v187
      %413 = vmatprep.subr.bf16.mxu0 %v190
      %414 = vmatpush1.bf16.msra.mxu0 %v189
      %415 = vmatprep.subr.bf16.mxu0 %v192
      %416 = vmatpush1.bf16.msra.mxu0 %v191
      %417 = vmatprep.subr.bf16.mxu0 %v194
      %418 = vmatpush1.bf16.msra.mxu0 %v193
      %419 = vmatprep.subr.bf16.mxu0 %v196
      %420 = vmatpush1.bf16.msra.mxu0 %v195
      %421 = vmatprep.subr.bf16.mxu0 %v198
      %422 = vmatpush1.bf16.msra.mxu0 %v197
      %423 = vmatprep.subr.bf16.mxu0 %v200
      %424 = vmatpush1.bf16.msra.mxu0 %v199
      %425 = vmatprep.subr.bf16.mxu0 %v202
      %426 = vmatpush1.bf16.msra.mxu0 %v201
      %427 = vmatprep.subr.bf16.mxu0 %v204
      %428 = vmatpush1.bf16.msra.mxu0 %v203
      %429 = vmatprep.mubr.bf16.mxu0 %v396
      %430 = vmatmul.mubr.bf16.gmra.mrb[0].mxu0 %v395
      %v431 = vpop.f32.mrb[0].mxu0
      %v432 = vadd.f32 %v41, %v431
      %v433 = vpop.f32.mrb[0].mxu0
      %v434 = vadd.f32 %v42, %v433
      %v435 = vpop.f32.mrb[0].mxu0
      %v436 = vadd.f32 %v43, %v435
      %v437 = vpop.f32.mrb[0].mxu0
      %v438 = vadd.f32 %v44, %v437
      %439 = vdwg.mxu0
      %v440 = vtanh.pop %v432
      %v441 = vtanh.pop %v434
      %v442 = vtanh.pop %v436
      %v443 = vtanh.pop %v438
      %v444 = vpack.c.bf16 %v442, %v440
      %v445 = vpack.c.bf16 %v443, %v441
      %446 = vmatprep.subr.bf16.mxu0 %v174
      %447 = vmatpush1.bf16.msra.mxu0 %v173
      %448 = vmatprep.subr.bf16.mxu0 %v176
      %449 = vmatpush1.bf16.msra.mxu0 %v175
      %450 = vmatprep.subr.bf16.mxu0 %v178
      %451 = vmatpush1.bf16.msra.mxu0 %v177
      %452 = vmatprep.subr.bf16.mxu0 %v180
      %453 = vmatpush1.bf16.msra.mxu0 %v179
      %454 = vmatprep.subr.bf16.mxu0 %v182
      %455 = vmatpush1.bf16.msra.mxu0 %v181
      %456 = vmatprep.subr.bf16.mxu0 %v184
      %457 = vmatpush1.bf16.msra.mxu0 %v183
      %458 = vmatprep.subr.bf16.mxu0 %v186
      %459 = vmatpush1.bf16.msra.mxu0 %v185
      %460 = vmatprep.subr.bf16.mxu0 %v188
      %461 = vmatpush1.bf16.msra.mxu0 %v187
      %462 = vmatprep.subr.bf16.mxu0 %v190
      %463 = vmatpush1.bf16.msra.mxu0 %v189
      %464 = vmatprep.subr.bf16.mxu0 %v192
      %465 = vmatpush1.bf16.msra.mxu0 %v191
      %466 = vmatprep.subr.bf16.mxu0 %v194
      %467 = vmatpush1.bf16.msra.mxu0 %v193
      %468 = vmatprep.subr.bf16.mxu0 %v196
      %469 = vmatpush1.bf16.msra.mxu0 %v195
      %470 = vmatprep.subr.bf16.mxu0 %v198
      %471 = vmatpush1.bf16.msra.mxu0 %v197
      %472 = vmatprep.subr.bf16.mxu0 %v200
      %473 = vmatpush1.bf16.msra.mxu0 %v199
      %474 = vmatprep.subr.bf16.mxu0 %v202
      %475 = vmatpush1.bf16.msra.mxu0 %v201
      %476 = vmatprep.subr.bf16.mxu0 %v204
      %477 = vmatpush1.bf16.msra.mxu0 %v203
      %478 = vmatprep.mubr.bf16.mxu0 %v445
      %479 = vmatmul.mubr.bf16.gmra.mrb[0].mxu0 %v444
      %v480 = vpop.f32.mrb[0].mxu0
      %v481 = vadd.f32 %v41, %v480
      %v482 = vpop.f32.mrb[0].mxu0
      %v483 = vadd.f32 %v42, %v482
      %v484 = vpop.f32.mrb[0].mxu0
      %v485 = vadd.f32 %v43, %v484
      %v486 = vpop.f32.mrb[0].mxu0
      %v487 = vadd.f32 %v44, %v486
      %488 = vdwg.mxu0
      %v489 = vtanh.pop %v481
      %v490 = vtanh.pop %v483
      %v491 = vtanh.pop %v485
      %v492 = vtanh.pop %v487
      %v493 = vsub.f32 %v489, %v440
      %v494 = vsub.f32 %v490, %v441
      %v495 = vsub.f32 %v491, %v442
      %v496 = vsub.f32 %v492, %v443
      %v497 = vmul.f32 %v493, %v493
      %v498 = vmul.f32 %v494, %v494
      %v499 = vmul.f32 %v495, %v495
      %v500 = vmul.f32 %v496, %v496
      %v501 = vmul.f32 %v489, %v489
      %v502 = vmul.f32 %v490, %v490
      %v503 = vmul.f32 %v491, %v491
      %v504 = vmul.f32 %v492, %v492
      %v505 = vmul.f32 %v501, 1e-06
      %v506 = vmul.f32 %v502, 1e-06
      %v507 = vmul.f32 %v503, 1e-06
      %v508 = vmul.f32 %v504, 1e-06
      %v509 = vsub.f32 %v497, %v505
      %v510 = vsub.f32 %v498, %v506
      %v511 = vsub.f32 %v499, %v507
      %v512 = vsub.f32 %v500, %v508
      %v513 = vadd.f32 %v509, %v510
      %v514 = vadd.f32 %v513, %v511
      %v515 = vadd.f32 %v514, %v512
      %516 = vadd.xlane.f32.xlu0 %v515
      %v517 = vpop.xlane.xlu0 %516
      %v518 = vrot.slane %v517, 4
      %v519 = vadd.f32 %v517, %v518
      %v520 = vrot.slane %v519, 2
      %v521 = vadd.f32 %v519, %v520
      %v522 = vrot.slane %v521, 1
      %v523 = vadd.f32 %v521, %v522
      %s524 = vtos %v523
      %p525 = scmp.ge.f32.partialorder %s524, 1e-12
      %s526 = scalar_select %p525, 1, 0
      %s527 = sadd.s32 %s285, 4
    $region22: #{tpu_custom_call.1} parent=1 // loop_footer
      _
    $region23: #{tpu_custom_call.1} parent=1 // loop_footer_branch
      %284 = sbr.rel target = $region19
    $region24: #{tpu_custom_call.1} parent=1 // loop_exit
      _
    %v528 = vpack.c.bf16 %v288, %v286
    %v529 = vpack.c.bf16 %v289, %v287
    %530 = vmatprep.subr.bf16.mxu0 %v174
    %531 = vmatpush1.bf16.msra.mxu0 %v173
    %532 = vmatprep.subr.bf16.mxu0 %v176
    %533 = vmatpush1.bf16.msra.mxu0 %v175
    %534 = vmatprep.subr.bf16.mxu0 %v178
    %535 = vmatpush1.bf16.msra.mxu0 %v177
    %536 = vmatprep.subr.bf16.mxu0 %v180
    %537 = vmatpush1.bf16.msra.mxu0 %v179
    %538 = vmatprep.subr.bf16.mxu0 %v182
    %539 = vmatpush1.bf16.msra.mxu0 %v181
    %540 = vmatprep.subr.bf16.mxu0 %v184
    %541 = vmatpush1.bf16.msra.mxu0 %v183
    %542 = vmatprep.subr.bf16.mxu0 %v186
    %543 = vmatpush1.bf16.msra.mxu0 %v185
    %544 = vmatprep.subr.bf16.mxu0 %v188
    %545 = vmatpush1.bf16.msra.mxu0 %v187
    %546 = vmatprep.subr.bf16.mxu0 %v190
    %547 = vmatpush1.bf16.msra.mxu0 %v189
    %548 = vmatprep.subr.bf16.mxu0 %v192
    %549 = vmatpush1.bf16.msra.mxu0 %v191
    %550 = vmatprep.subr.bf16.mxu0 %v194
    %551 = vmatpush1.bf16.msra.mxu0 %v193
    %552 = vmatprep.subr.bf16.mxu0 %v196
    %553 = vmatpush1.bf16.msra.mxu0 %v195
    %554 = vmatprep.subr.bf16.mxu0 %v198
    %555 = vmatpush1.bf16.msra.mxu0 %v197
    %556 = vmatprep.subr.bf16.mxu0 %v200
    %557 = vmatpush1.bf16.msra.mxu0 %v199
    %558 = vmatprep.subr.bf16.mxu0 %v202
    %559 = vmatpush1.bf16.msra.mxu0 %v201
    %560 = vmatprep.subr.bf16.mxu0 %v204
    %561 = vmatpush1.bf16.msra.mxu0 %v203
    %562 = vmatprep.mubr.bf16.mxu0 %v529
    %563 = vmatmul.mubr.bf16.gmra.mrb[0].mxu0 %v528
    %v564 = vpop.f32.mrb[0].mxu0
    %v565 = vadd.f32 %v41, %v564
    %v566 = vpop.f32.mrb[0].mxu0
    %v567 = vadd.f32 %v42, %v566
    %v568 = vpop.f32.mrb[0].mxu0
    %v569 = vadd.f32 %v43, %v568
    %v570 = vpop.f32.mrb[0].mxu0
    %v571 = vadd.f32 %v44, %v570
    %572 = vdwg.mxu0
    %v573 = vtanh.pop %v565
    %v574 = vtanh.pop %v567
    %v575 = vtanh.pop %v569
    %v576 = vtanh.pop %v571
    %577 = vst [vmem:[#allocation7] sm:$0xff] %v573
    %578 = vst [vmem:[#allocation7 + $0x8] sm:$0xff] %v574
    %579 = vst [vmem:[#allocation7 + $0x10] sm:$0xff] %v575
    %580 = vst [vmem:[#allocation7 + $0x18] sm:$0xff] %v576
    // Predicated region
    $region25: #{tpu_custom_call.1} parent=1 // pred_check
      _
    $region26: #{tpu_custom_call.1} parent=1 // pred_check_branch
      %582 = sbr.rel (0) target = $region28
    $region27: #{tpu_custom_call.1} parent=1 // pred_region
      %s584 = ssub.s32 512, 512
      %585 = vsyncadd [#allocation4], %s584
      %s586 = sshll.u32 [#allocation7], 4
      %s587 = int_to_ptr.vmem [resolvable:$true] %s586
      %592 = dma.vmem_to_hbm [thread:$0]  %s587, 512, %s2, [#allocation4], 256, 256, 16
    $region28: #{tpu_custom_call.1} parent=1 // pred_fallthru
      _
    // Predicated region
    $region29: #{tpu_custom_call.1} parent=1 // pred_check
      _
    $region30: #{tpu_custom_call.1} parent=1 // pred_check_branch
      %594 = sbr.rel (0) target = $region32
    $region31: #{tpu_custom_call.1} parent=1 // pred_region
      %595 = dma.done [#allocation4], 512
    $region32: #{tpu_custom_call.1} parent=1 // pred_fallthru
      _
    %596 = vsyncpa [#allocation3], 1
    %597 = vsyncpa [#allocation6], 1
    %598 = vsyncpa [#allocation4], 1

</llo_original>
